<compile_context>
chip_gen: v7x
topology: tpu7x:2x2x1
jax: 0.10.0
libtpu: 0.0.40
codegen_flags: <defaults>
</compile_context>

<pallas_src>
import jax
import jax.numpy as jnp
from jax import lax
from jax.experimental import pallas as pl
from jax.experimental.pallas import tpu as pltpu


# ----------------------------- Pallas kernel --------------------------------

def _make_netstart_kernel(num_nt_layers: int, num_ranks: int, vocab_pad: int,
                          compute_dtype):
    """Kernel over refs laid out as:
       [x_blk, tax_blk, table_fused,
        (w_nt_i, b_nt_i) * L, w2a, b2, w_clsT, b_cls, out_blk]
    """

    def kernel(*refs):
        x_ref, tax_ref, tabf_ref = refs[0], refs[1], refs[2]
        idx = 3
        tm = x_ref.shape[0]

        # --- fused taxonomy gather+sum, pre-folded through W2's embedding rows ---
        # counts[r, v] = #{k : tax_global[r, k] == v}
        # emb_merge    = counts @ (emb_table_cat @ w2b)   -- single aligned K=128 pass
        tax = tax_ref[...]                                            # (tm, 7) int32
        iota_v = lax.broadcasted_iota(jnp.int32, (tm, vocab_pad), 1)
        counts = jnp.zeros((tm, vocab_pad), jnp.float32)
        for k in range(num_ranks):
            counts = counts + (iota_v == tax[:, k:k + 1]).astype(jnp.float32)
        emb_merge = jnp.dot(counts.astype(compute_dtype), tabf_ref[...],
                            preferred_element_type=jnp.float32)       # (tm, hidden_merge)

        # --- nt MLP stack: Linear -> ReLU (dropout_1 identity in eval) ----------
        h = x_ref[...]
        for _ in range(num_nt_layers):
            w_ref, b_ref = refs[idx], refs[idx + 1]
            idx += 2
            acc = jnp.dot(h, w_ref[...], preferred_element_type=jnp.float32) + b_ref[...]
            h = jnp.maximum(acc, 0.0).astype(compute_dtype)

        # --- merge: concat([h, emb]) @ W2 + b2 == h@W2a + counts@(table@W2b) + b2 --
        w2a_ref, b2_ref = refs[idx], refs[idx + 1]
        idx += 2
        h2 = (jnp.dot(h, w2a_ref[...], preferred_element_type=jnp.float32)
              + emb_merge + b2_ref[...])
        h2 = jnp.maximum(h2, 0.0).astype(compute_dtype)

        # --- classifier, transposed so the store is lane-dense -------------------
        # logits_t[l, r] = sum_h w_clsT[l, h] * h2[r, h]   -> (num_labels, tm)
        wcT_ref, bc_ref, out_ref = refs[idx], refs[idx + 1], refs[idx + 2]
        num_labels = wcT_ref.shape[0]
        logits_t = lax.dot_general(wcT_ref[...], h2,
                                   (((1,), (1,)), ((), ())),
                                   preferred_element_type=jnp.float32)
        res = (logits_t + bc_ref[...]).astype(out_ref.dtype)
        out_ref[...] = res.reshape(1, num_labels, tm)

    return kernel


# ------------------------------- wrapper -------------------------------------

def netstart1_forward_pallas(x_nt, tax_ranks, params, *, block_rows=None,
                             compute_dtype=jnp.bfloat16):
    """Forward pass matching NetStart1Model.forward (eval mode).

    x_nt:      (B, ...) float — flattened to (B, nt_encoding_length)
    tax_ranks: (B, 7) int32
    params:    dict produced by init_params()
    """
    B = x_nt.shape[0]
    x_flat = x_nt.reshape(B, -1).astype(compute_dtype)
    nt_len = x_flat.shape[1]

    table_cat = params["emb_table_cat"]                  # (total_vocab, emb_size)
    offsets = params["emb_offsets"]                      # (7,) int32
    total_vocab, _ = table_cat.shape
    num_ranks = int(offsets.shape[0])

    nt_layers = params["nt_layers"]
    L = len(nt_layers)
    hidden_nt = nt_layers[0][0].shape[1]
    w2a, w2b, b2 = params["w2a"], params["w2b"], params["b2"]
    w_cls, b_cls = params["w_cls"], params["b_cls"]
    hidden_merge = w2a.shape[1]
    num_labels = w_cls.shape[1]

    # Fold w2b into the table and zero-pad the vocab up to a multiple of 128
    # (lane-dense one-hot, aligned K for the gather matmul).
    table_fused = (table_cat.astype(jnp.float32) @ w2b.astype(jnp.float32))
    vocab_pad = max(128, -(-total_vocab // 128) * 128)
    table_fused = jnp.pad(table_fused,
                          ((0, vocab_pad - total_vocab), (0, 0))).astype(compute_dtype)

    # Global row ids into the concatenated table (clamped: reference would error OOB).
    tax_global = jnp.clip(tax_ranks.astype(jnp.int32) + offsets[None, :],
                          0, total_vocab - 1).astype(jnp.int32)

    # Batch tiling.
    if block_rows is None:
        if B >= 512:
            block_rows = 256      # fills 256-wide MXU; TODO(synk): sweep 256/512 on v6e
        elif B >= 256:
            block_rows = 128      # keeps >= 2 grid steps for v7x megacore sharding
        elif B >= 64:
            block_rows = ((-(-B // 2)) + 7) // 8 * 8   # 2 tiles
        else:
            block_rows = max(8, ((B + 7) // 8) * 8)    # single small tile
    tm = block_rows
    B_pad = -(-B // tm) * tm
    if B_pad != B:
        # Padded rows: x=0 and tax id 0 -> zeroed padding row of the fused table;
        # results are sliced off below.
        x_flat = jnp.pad(x_flat, ((0, B_pad - B), (0, 0)))
        tax_global = jnp.pad(tax_global, ((0, B_pad - B), (0, 0)))
    num_tiles = B_pad // tm

    # --- operands + BlockSpecs ------------------------------------------------
    # Activations stream per batch tile; weights/table have constant index_maps so
    # they remain VMEM-resident across the whole grid (activation-streaming only).
    operands = [x_flat, tax_global, table_fused]
    in_specs = [
        pl.BlockSpec((tm, nt_len), lambda i: (i, 0)),
        pl.BlockSpec((tm, num_ranks), lambda i: (i, 0)),
        pl.BlockSpec((vocab_pad, hidden_merge), lambda i: (0, 0)),
    ]
    for w, b in nt_layers:
        wc = w.astype(compute_dtype)
        b2d = b.reshape(1, -1).astype(jnp.float32)
        operands += [wc, b2d]
        in_specs += [pl.BlockSpec(wc.shape, lambda i: (0, 0)),
                     pl.BlockSpec(b2d.shape, lambda i: (0, 0))]
    w2a_c = w2a.astype(compute_dtype)
    b2_2d = b2.reshape(1, -1).astype(jnp.float32)
    wcT = jnp.transpose(w_cls).astype(compute_dtype)        # (num_labels, hidden_merge)
    bc_2d = b_cls.reshape(-1, 1).astype(jnp.float32)        # (num_labels, 1)
    operands += [w2a_c, b2_2d, wcT, bc_2d]
    in_specs += [pl.BlockSpec(w2a_c.shape, lambda i: (0, 0)),
                 pl.BlockSpec(b2_2d.shape, lambda i: (0, 0)),
                 pl.BlockSpec(wcT.shape, lambda i: (0, 0)),
                 pl.BlockSpec(bc_2d.shape, lambda i: (0, 0))]

    # Lane-dense transposed output: (num_tiles, num_labels, tm); row tile i of the
    # batch lives in out[i], laid out along lanes.
    out_shape = jax.ShapeDtypeStruct((num_tiles, num_labels, tm), jnp.float32)
    out_specs = pl.BlockSpec((1, num_labels, tm), lambda i: (i, 0, 0))

    # --- advisory cost estimate -----------------------------------------------
    flops_per_row = (2 * nt_len * hidden_nt
                     + 2 * (L - 1) * hidden_nt * hidden_nt
                     + 2 * vocab_pad * hidden_merge
                     + 2 * hidden_nt * hidden_merge
                     + 2 * hidden_merge * num_labels)
    bytes_accessed = int(sum(int(o.size) * o.dtype.itemsize for o in operands)
                         + B_pad * num_labels * 4)
    cost = pl.CostEstimate(flops=int(B_pad * flops_per_row),
                           transcendentals=0,
                           bytes_accessed=bytes_accessed)

    kernel = _make_netstart_kernel(L, num_ranks, vocab_pad, compute_dtype)

    out = pl.pallas_call(
        kernel,
        out_shape=out_shape,
        grid_spec=pltpu.PrefetchScalarGridSpec(
            num_scalar_prefetch=0,
            grid=(num_tiles,),
            in_specs=in_specs,
            out_specs=out_specs,
        ),
        compiler_params=pltpu.CompilerParams(
            dimension_semantics=("parallel",)),
        cost_estimate=cost,
    )(*operands)

    # (num_tiles, num_labels, tm) -> (B, num_labels)
    return out.transpose(0, 2, 1).reshape(B_pad, num_labels)[:B]


# ----------------------------- parameter init --------------------------------

def init_params(key, nt_encoding_length, vocab_sizes, emb_size,
                hidden_neurons_nt, hidden_neurons_merge,
                num_hidden_layers_nt, num_labels=1):
    """Deterministic synthetic init mirroring the PyTorch module's shapes.
    Linear weights are stored transposed as (in, out). Embedding row 0 of every
    table is zeroed (padding_idx=0)."""
    keys = jax.random.split(key, 32)
    ki = iter(range(32))

    def dense(k, fan_in, fan_out):
        return jax.random.normal(k, (fan_in, fan_out), jnp.float32) * 0.02

    nt_layers = []
    in_dim = nt_encoding_length
    for _ in range(num_hidden_layers_nt):
        w = dense(keys[next(ki)], in_dim, hidden_neurons_nt)
        b = jax.random.normal(keys[next(ki)], (hidden_neurons_nt,), jnp.float32) * 0.02
        nt_layers.append((w, b))
        in_dim = hidden_neurons_nt

    emb_tables = []
    for vs in vocab_sizes:
        t = jax.random.normal(keys[next(ki)], (vs, emb_size), jnp.float32) * 0.02
        t = t.at[0].set(0.0)          # padding_idx=0
        emb_tables.append(t)

    # concatenated table + per-rank row offsets (for the fused in-kernel gather)
    emb_table_cat = jnp.concatenate(emb_tables, axis=0)
    offs, acc = [], 0
    for vs in vocab_sizes:
        offs.append(acc)
        acc += vs
    emb_offsets = jnp.asarray(offs, dtype=jnp.int32)

    # hidden_layer_2 : Linear(hidden_neurons_nt + emb_size, hidden_neurons_merge)
    w2 = dense(keys[next(ki)], hidden_neurons_nt + emb_size, hidden_neurons_merge)
    b2 = jax.random.normal(keys[next(ki)], (hidden_neurons_merge,), jnp.float32) * 0.02
    w2a = w2[:hidden_neurons_nt, :]    # rows acting on hidden_nt
    w2b = w2[hidden_neurons_nt:, :]    # rows acting on embeddings_tax

    w_cls = dense(keys[next(ki)], hidden_neurons_merge, num_labels)
    b_cls = jax.random.normal(keys[next(ki)], (num_labels,), jnp.float32) * 0.02

    return dict(nt_layers=nt_layers, emb_tables=emb_tables, emb_size=emb_size,
                emb_table_cat=emb_table_cat, emb_offsets=emb_offsets,
                w2a=w2a, w2b=w2b, b2=b2, w_cls=w_cls, b_cls=b_cls)


# ----------------------------- pure-JAX reference ----------------------------

def netstart1_forward_ref(x_nt, tax_ranks, params):
    B = x_nt.shape[0]
    h = x_nt.reshape(B, -1).astype(jnp.float32)
    for w, b in params["nt_layers"]:
        h = jnp.maximum(h @ w + b, 0.0)
    emb = jnp.zeros((B, params["emb_size"]), jnp.float32)
    for i, t in enumerate(params["emb_tables"]):
        emb = emb + t[tax_ranks[:, i]]
    h2 = jnp.maximum(h @ params["w2a"] + emb @ params["w2b"] + params["b2"], 0.0)
    return h2 @ params["w_cls"] + params["b_cls"]


# ----------------------------------- main -------------------------------------

if __name__ == "__main__":
    # Small, module-consistent hyperparameters.
    seq_len, nt_channels = 64, 4            # x_nt given as (B, 64, 4) -> flattened 256
    nt_encoding_length = seq_len * nt_channels
    vocab_sizes = [11, 9, 8, 7, 6, 5, 4]    # species .. kingdom
    emb_size = 32
    hidden_neurons_nt = 128
    hidden_neurons_merge = 64
    num_hidden_layers_nt = 2
    num_labels = 1

    key = jax.random.PRNGKey(0)
    k_params, k_x, k_tax = jax.random.split(key, 3)

    params = init_params(k_params, nt_encoding_length, vocab_sizes, emb_size,
                         hidden_neurons_nt, hidden_neurons_merge,
                         num_hidden_layers_nt, num_labels)

    # Two batch sizes: tiny (single tile) and one that exercises multi-tile grid +
    # batch padding (B=300 -> tm=128, grid=3).
    for B in (8, 300):
        kx = jax.random.fold_in(k_x, B)
        kt = jax.random.fold_in(k_tax, B)
        x_nt = jax.random.normal(kx, (B, seq_len, nt_channels), jnp.float32)
        tax_ranks = jnp.stack(
            [jax.random.randint(jax.random.fold_in(kt, i), (B,), 0, vocab_sizes[i])
             for i in range(7)], axis=1).astype(jnp.int32)

        out = netstart1_forward_pallas(x_nt, tax_ranks, params)
        out = jax.block_until_ready(out)

        ref = netstart1_forward_ref(x_nt, tax_ranks, params)
        assert out.shape == (B, num_labels), out.shape
        # bf16 compute with f32 accumulation vs f32 reference.
        assert jnp.allclose(out, ref, atol=2e-2, rtol=2e-2), (
            B, float(jnp.max(jnp.abs(out - ref))))

    print("KERNEL_OK")
</pallas_src>

<mosaic_0001>
module attributes {stable_mosaic.version = 11 : i64} {
  func.func @kernel(%arg0: i32, %arg1: memref<8x256xbf16, #tpu.memory_space<vmem>>, %arg2: memref<8x7xi32, #tpu.memory_space<vmem>>, %arg3: memref<128x64xbf16, #tpu.memory_space<vmem>>, %arg4: memref<256x128xbf16, #tpu.memory_space<vmem>>, %arg5: memref<1x128xf32, #tpu.memory_space<vmem>>, %arg6: memref<128x128xbf16, #tpu.memory_space<vmem>>, %arg7: memref<1x128xf32, #tpu.memory_space<vmem>>, %arg8: memref<128x64xbf16, #tpu.memory_space<vmem>>, %arg9: memref<1x64xf32, #tpu.memory_space<vmem>>, %arg10: memref<1x64xbf16, #tpu.memory_space<vmem>>, %arg11: memref<1x1xf32, #tpu.memory_space<vmem>>, %arg12: memref<1x1x8xf32, #tpu.memory_space<vmem>>) attributes {dimension_semantics = [#tpu.dimension_semantics<parallel>], iteration_bounds = array<i64: 1>, scalar_prefetch = 0 : i64, scratch_operands = 0 : i64, tpu.core_type = #tpu.core_type<tc>, window_params = [{transform_indices = @transform_0, window_bounds = array<i64: 8, 256>}, {transform_indices = @transform_1, window_bounds = array<i64: 8, 7>}, {pipeline_mode = #tpu.pipeline_mode<synchronous>, transform_indices = @transform_2, window_bounds = array<i64: 128, 64>}, {pipeline_mode = #tpu.pipeline_mode<synchronous>, transform_indices = @transform_3, window_bounds = array<i64: 256, 128>}, {pipeline_mode = #tpu.pipeline_mode<synchronous>, transform_indices = @transform_4, window_bounds = array<i64: 1, 128>}, {pipeline_mode = #tpu.pipeline_mode<synchronous>, transform_indices = @transform_5, window_bounds = array<i64: 128, 128>}, {pipeline_mode = #tpu.pipeline_mode<synchronous>, transform_indices = @transform_6, window_bounds = array<i64: 1, 128>}, {pipeline_mode = #tpu.pipeline_mode<synchronous>, transform_indices = @transform_7, window_bounds = array<i64: 128, 64>}, {pipeline_mode = #tpu.pipeline_mode<synchronous>, transform_indices = @transform_8, window_bounds = array<i64: 1, 64>}, {pipeline_mode = #tpu.pipeline_mode<synchronous>, transform_indices = @transform_9, window_bounds = array<i64: 1, 64>}, {pipeline_mode = #tpu.pipeline_mode<synchronous>, transform_indices = @transform_10, window_bounds = array<i64: 1, 1>}, {transform_indices = @transform_11, window_bounds = array<i64: 1, 1, 8>}]} {
    %c0 = arith.constant 0 : index
    %c0_0 = arith.constant 0 : index
    %0 = vector.load %arg2[%c0, %c0_0] : memref<8x7xi32, #tpu.memory_space<vmem>>, vector<8x7xi32>
    %1 = tpu.iota {dimensions = array<i32: 1>} : vector<8x128xi32>
    %cst = arith.constant 0.000000e+00 : f32
    %2 = vector.broadcast %cst : f32 to vector<8x128xf32>
    %3 = vector.extract_strided_slice %0 {offsets = [0, 0], sizes = [8, 1], strides = [1, 1]} : vector<8x7xi32> to vector<8x1xi32>
    %4 = vector.broadcast %3 : vector<8x1xi32> to vector<8x128xi32>
    %5 = arith.cmpi eq, %1, %4 : vector<8x128xi32>
    %6 = arith.extui %5 : vector<8x128xi1> to vector<8x128xi32>
    %7 = arith.sitofp %6 : vector<8x128xi32> to vector<8x128xf32>
    %8 = arith.addf %2, %7 : vector<8x128xf32>
    %9 = vector.extract_strided_slice %0 {offsets = [0, 1], sizes = [8, 1], strides = [1, 1]} : vector<8x7xi32> to vector<8x1xi32>
    %10 = vector.broadcast %9 : vector<8x1xi32> to vector<8x128xi32>
    %11 = arith.cmpi eq, %1, %10 : vector<8x128xi32>
    %12 = arith.extui %11 : vector<8x128xi1> to vector<8x128xi32>
    %13 = arith.sitofp %12 : vector<8x128xi32> to vector<8x128xf32>
    %14 = arith.addf %8, %13 : vector<8x128xf32>
    %15 = vector.extract_strided_slice %0 {offsets = [0, 2], sizes = [8, 1], strides = [1, 1]} : vector<8x7xi32> to vector<8x1xi32>
    %16 = vector.broadcast %15 : vector<8x1xi32> to vector<8x128xi32>
    %17 = arith.cmpi eq, %1, %16 : vector<8x128xi32>
    %18 = arith.extui %17 : vector<8x128xi1> to vector<8x128xi32>
    %19 = arith.sitofp %18 : vector<8x128xi32> to vector<8x128xf32>
    %20 = arith.addf %14, %19 : vector<8x128xf32>
    %21 = vector.extract_strided_slice %0 {offsets = [0, 3], sizes = [8, 1], strides = [1, 1]} : vector<8x7xi32> to vector<8x1xi32>
    %22 = vector.broadcast %21 : vector<8x1xi32> to vector<8x128xi32>
    %23 = arith.cmpi eq, %1, %22 : vector<8x128xi32>
    %24 = arith.extui %23 : vector<8x128xi1> to vector<8x128xi32>
    %25 = arith.sitofp %24 : vector<8x128xi32> to vector<8x128xf32>
    %26 = arith.addf %20, %25 : vector<8x128xf32>
    %27 = vector.extract_strided_slice %0 {offsets = [0, 4], sizes = [8, 1], strides = [1, 1]} : vector<8x7xi32> to vector<8x1xi32>
    %28 = vector.broadcast %27 : vector<8x1xi32> to vector<8x128xi32>
    %29 = arith.cmpi eq, %1, %28 : vector<8x128xi32>
    %30 = arith.extui %29 : vector<8x128xi1> to vector<8x128xi32>
    %31 = arith.sitofp %30 : vector<8x128xi32> to vector<8x128xf32>
    %32 = arith.addf %26, %31 : vector<8x128xf32>
    %33 = vector.extract_strided_slice %0 {offsets = [0, 5], sizes = [8, 1], strides = [1, 1]} : vector<8x7xi32> to vector<8x1xi32>
    %34 = vector.broadcast %33 : vector<8x1xi32> to vector<8x128xi32>
    %35 = arith.cmpi eq, %1, %34 : vector<8x128xi32>
    %36 = arith.extui %35 : vector<8x128xi1> to vector<8x128xi32>
    %37 = arith.sitofp %36 : vector<8x128xi32> to vector<8x128xf32>
    %38 = arith.addf %32, %37 : vector<8x128xf32>
    %39 = vector.extract_strided_slice %0 {offsets = [0, 6], sizes = [8, 1], strides = [1, 1]} : vector<8x7xi32> to vector<8x1xi32>
    %40 = vector.broadcast %39 : vector<8x1xi32> to vector<8x128xi32>
    %41 = arith.cmpi eq, %1, %40 : vector<8x128xi32>
    %42 = arith.extui %41 : vector<8x128xi1> to vector<8x128xi32>
    %43 = arith.sitofp %42 : vector<8x128xi32> to vector<8x128xf32>
    %44 = arith.addf %38, %43 : vector<8x128xf32>
    %45 = arith.truncf %44 : vector<8x128xf32> to vector<8x128xbf16>
    %c0_1 = arith.constant 0 : index
    %c0_2 = arith.constant 0 : index
    %46 = vector.load %arg3[%c0_1, %c0_2] : memref<128x64xbf16, #tpu.memory_space<vmem>>, vector<128x64xbf16>
    %cst_3 = arith.constant dense<0.000000e+00> : vector<8x64xf32>
    %47 = tpu.matmul %45, %46, %cst_3 {dimension_numbers = #tpu.dot_dimension_numbers<[1], [0], [0], [1], [0, 0, 1, 1], [], []>} : vector<8x128xbf16>, vector<128x64xbf16>, vector<8x64xf32> -> vector<8x64xf32>
    %c0_4 = arith.constant 0 : index
    %c0_5 = arith.constant 0 : index
    %48 = vector.load %arg1[%c0_4, %c0_5] : memref<8x256xbf16, #tpu.memory_space<vmem>>, vector<8x256xbf16>
    %c0_6 = arith.constant 0 : index
    %c0_7 = arith.constant 0 : index
    %49 = vector.load %arg4[%c0_6, %c0_7] : memref<256x128xbf16, #tpu.memory_space<vmem>>, vector<256x128xbf16>
    %cst_8 = arith.constant dense<0.000000e+00> : vector<8x128xf32>
    %50 = tpu.matmul %48, %49, %cst_8 {dimension_numbers = #tpu.dot_dimension_numbers<[1], [0], [0], [1], [0, 0, 1, 1], [], []>} : vector<8x256xbf16>, vector<256x128xbf16>, vector<8x128xf32> -> vector<8x128xf32>
    %c0_9 = arith.constant 0 : index
    %c0_10 = arith.constant 0 : index
    %51 = vector.load %arg5[%c0_9, %c0_10] : memref<1x128xf32, #tpu.memory_space<vmem>>, vector<1x128xf32>
    %52 = vector.broadcast %51 : vector<1x128xf32> to vector<8x128xf32>
    %53 = arith.addf %50, %52 : vector<8x128xf32>
    %cst_11 = arith.constant 0.000000e+00 : f32
    %54 = vector.broadcast %cst_11 : f32 to vector<8x128xf32>
    %55 = arith.maximumf %53, %54 : vector<8x128xf32>
    %56 = arith.truncf %55 : vector<8x128xf32> to vector<8x128xbf16>
    %c0_12 = arith.constant 0 : index
    %c0_13 = arith.constant 0 : index
    %57 = vector.load %arg6[%c0_12, %c0_13] : memref<128x128xbf16, #tpu.memory_space<vmem>>, vector<128x128xbf16>
    %cst_14 = arith.constant dense<0.000000e+00> : vector<8x128xf32>
    %58 = tpu.matmul %56, %57, %cst_14 {dimension_numbers = #tpu.dot_dimension_numbers<[1], [0], [0], [1], [0, 0, 1, 1], [], []>} : vector<8x128xbf16>, vector<128x128xbf16>, vector<8x128xf32> -> vector<8x128xf32>
    %c0_15 = arith.constant 0 : index
    %c0_16 = arith.constant 0 : index
    %59 = vector.load %arg7[%c0_15, %c0_16] : memref<1x128xf32, #tpu.memory_space<vmem>>, vector<1x128xf32>
    %60 = vector.broadcast %59 : vector<1x128xf32> to vector<8x128xf32>
    %61 = arith.addf %58, %60 : vector<8x128xf32>
    %cst_17 = arith.constant 0.000000e+00 : f32
    %62 = vector.broadcast %cst_17 : f32 to vector<8x128xf32>
    %63 = arith.maximumf %61, %62 : vector<8x128xf32>
    %64 = arith.truncf %63 : vector<8x128xf32> to vector<8x128xbf16>
    %c0_18 = arith.constant 0 : index
    %c0_19 = arith.constant 0 : index
    %65 = vector.load %arg8[%c0_18, %c0_19] : memref<128x64xbf16, #tpu.memory_space<vmem>>, vector<128x64xbf16>
    %cst_20 = arith.constant dense<0.000000e+00> : vector<8x64xf32>
    %66 = tpu.matmul %64, %65, %cst_20 {dimension_numbers = #tpu.dot_dimension_numbers<[1], [0], [0], [1], [0, 0, 1, 1], [], []>} : vector<8x128xbf16>, vector<128x64xbf16>, vector<8x64xf32> -> vector<8x64xf32>
    %67 = arith.addf %66, %47 : vector<8x64xf32>
    %c0_21 = arith.constant 0 : index
    %c0_22 = arith.constant 0 : index
    %68 = vector.load %arg9[%c0_21, %c0_22] : memref<1x64xf32, #tpu.memory_space<vmem>>, vector<1x64xf32>
    %69 = vector.broadcast %68 : vector<1x64xf32> to vector<8x64xf32>
    %70 = arith.addf %67, %69 : vector<8x64xf32>
    %cst_23 = arith.constant 0.000000e+00 : f32
    %71 = vector.broadcast %cst_23 : f32 to vector<8x64xf32>
    %72 = arith.maximumf %70, %71 : vector<8x64xf32>
    %73 = arith.truncf %72 : vector<8x64xf32> to vector<8x64xbf16>
    %c0_24 = arith.constant 0 : index
    %c0_25 = arith.constant 0 : index
    %74 = vector.load %arg10[%c0_24, %c0_25] : memref<1x64xbf16, #tpu.memory_space<vmem>>, vector<1x64xbf16>
    %cst_26 = arith.constant dense<0.000000e+00> : vector<1x8xf32>
    %75 = tpu.matmul %74, %73, %cst_26 {dimension_numbers = #tpu.dot_dimension_numbers<[1], [1], [0], [0], [0, 0, 1, 0], [], []>} : vector<1x64xbf16>, vector<8x64xbf16>, vector<1x8xf32> -> vector<1x8xf32>
    %c0_27 = arith.constant 0 : index
    %c0_28 = arith.constant 0 : index
    %76 = vector.load %arg11[%c0_27, %c0_28] : memref<1x1xf32, #tpu.memory_space<vmem>>, vector<1x1xf32>
    %77 = vector.broadcast %76 : vector<1x1xf32> to vector<1x8xf32>
    %78 = arith.addf %75, %77 : vector<1x8xf32>
    %79 = vector.shape_cast %78 : vector<1x8xf32> to vector<1x1x8xf32>
    %c0_29 = arith.constant 0 : index
    %c0_30 = arith.constant 0 : index
    %c0_31 = arith.constant 0 : index
    %80 = vector.load %arg12[%c0_29, %c0_30, %c0_31] : memref<1x1x8xf32, #tpu.memory_space<vmem>>, vector<1x1x8xf32>
    tpu.vector_store %arg12[%c0_29, %c0_30, %c0_31], %79 {strides = array<i32>} : memref<1x1x8xf32, #tpu.memory_space<vmem>>, vector<1x1x8xf32>,
    return
  }
  func.func @transform_0(%arg0: i32) -> (i32, i32) {
    %c0_i32 = arith.constant 0 : i32
    %c0_i32_0 = arith.constant 0 : i32
    return %arg0, %c0_i32 : i32, i32
  }
  func.func @transform_1(%arg0: i32) -> (i32, i32) {
    %c0_i32 = arith.constant 0 : i32
    %c0_i32_0 = arith.constant 0 : i32
    return %arg0, %c0_i32 : i32, i32
  }
  func.func @transform_2(%arg0: i32) -> (i32, i32) {
    %c0_i32 = arith.constant 0 : i32
    %c0_i32_0 = arith.constant 0 : i32
    %c0_i32_1 = arith.constant 0 : i32
    return %c0_i32, %c0_i32_0 : i32, i32
  }
  func.func @transform_3(%arg0: i32) -> (i32, i32) {
    %c0_i32 = arith.constant 0 : i32
    %c0_i32_0 = arith.constant 0 : i32
    %c0_i32_1 = arith.constant 0 : i32
    return %c0_i32, %c0_i32_0 : i32, i32
  }
  func.func @transform_4(%arg0: i32) -> (i32, i32) {
    %c0_i32 = arith.constant 0 : i32
    %c0_i32_0 = arith.constant 0 : i32
    %c0_i32_1 = arith.constant 0 : i32
    return %c0_i32, %c0_i32_0 : i32, i32
  }
  func.func @transform_5(%arg0: i32) -> (i32, i32) {
    %c0_i32 = arith.constant 0 : i32
    %c0_i32_0 = arith.constant 0 : i32
    %c0_i32_1 = arith.constant 0 : i32
    return %c0_i32, %c0_i32_0 : i32, i32
  }
  func.func @transform_6(%arg0: i32) -> (i32, i32) {
    %c0_i32 = arith.constant 0 : i32
    %c0_i32_0 = arith.constant 0 : i32
    %c0_i32_1 = arith.constant 0 : i32
    return %c0_i32, %c0_i32_0 : i32, i32
  }
  func.func @transform_7(%arg0: i32) -> (i32, i32) {
    %c0_i32 = arith.constant 0 : i32
    %c0_i32_0 = arith.constant 0 : i32
    %c0_i32_1 = arith.constant 0 : i32
    return %c0_i32, %c0_i32_0 : i32, i32
  }
  func.func @transform_8(%arg0: i32) -> (i32, i32) {
    %c0_i32 = arith.constant 0 : i32
    %c0_i32_0 = arith.constant 0 : i32
    %c0_i32_1 = arith.constant 0 : i32
    return %c0_i32, %c0_i32_0 : i32, i32
  }
  func.func @transform_9(%arg0: i32) -> (i32, i32) {
    %c0_i32 = arith.constant 0 : i32
    %c0_i32_0 = arith.constant 0 : i32
    %c0_i32_1 = arith.constant 0 : i32
    return %c0_i32, %c0_i32_0 : i32, i32
  }
  func.func @transform_10(%arg0: i32) -> (i32, i32) {
    %c0_i32 = arith.constant 0 : i32
    %c0_i32_0 = arith.constant 0 : i32
    %c0_i32_1 = arith.constant 0 : i32
    return %c0_i32, %c0_i32_0 : i32, i32
  }
  func.func @transform_11(%arg0: i32) -> (i32, i32, i32) {
    %c0_i32 = arith.constant 0 : i32
    %c0_i32_0 = arith.constant 0 : i32
    %c0_i32_1 = arith.constant 0 : i32
    return %arg0, %c0_i32, %c0_i32_0 : i32, i32, i32
  }
}

</mosaic_0001>

<llo_original>
// kernel: tpu_custom_call.1
$region0: #{tpu_custom_call.1}
  #allocation0 [shape = 'u32[]', space=smem, size = 0x4, offset = 0x4, fixed_abs, tag = 'smem constant byte address 0x4 - core index']
  #allocation1 [shape = 'u32[144,128]{1,0:T(1,128)}', space=vmem, size = 0x12000, scoped, tag = 'internal scratch']
  #allocation2 [shape = 'f32[1,1]{1,0:T(1,128)S(1)}', space=vmem, size = 0x200, scoped, tag = 'scoped memory for tpu_custom_call.1']
  %s0 = inlined_call_operand.vmem [shape: bf16[8,256], index: 0, kind: input, shape index: {}]
  %s1 = inlined_call_operand.hbm [shape: s32[8,7], index: 1, kind: input, shape index: {}]
  %s2 = inlined_call_operand.vmem [shape: bf16[128,64], index: 2, kind: input, shape index: {}]
  %s3 = inlined_call_operand.vmem [shape: bf16[256,128], index: 3, kind: input, shape index: {}]
  %s4 = inlined_call_operand.vmem [shape: f32[1,128], index: 4, kind: input, shape index: {}]
  %s5 = inlined_call_operand.vmem [shape: bf16[128,128], index: 5, kind: input, shape index: {}]
  %s6 = inlined_call_operand.vmem [shape: f32[1,128], index: 6, kind: input, shape index: {}]
  %s7 = inlined_call_operand.vmem [shape: bf16[128,64], index: 7, kind: input, shape index: {}]
  %s8 = inlined_call_operand.vmem [shape: f32[1,64], index: 8, kind: input, shape index: {}]
  %s9 = inlined_call_operand.vmem [shape: bf16[1,64], index: 9, kind: input, shape index: {}]
  %s10 = inlined_call_operand.<no memory space> [shape: f32[1,1], index: 10, kind: input, shape index: {}]
  %s11 = inlined_call_operand.hbm [shape: f32[1,1,8], index: 11, kind: output, shape index: {}]
  %s12 = sld [smem:[#allocation0]]
  $region58: #{tpu_custom_call.1} parent=0
    _
  %s14 = ssub.s32 1, %s12
  %s15 = scalar_select 0, %s14, %s12
  %v16 = vstv %s10
  %17 = vst [vmem:[#allocation2] sm:$0x1] %v16
  $region1: #{tpu_custom_call.1} parent=0
    #allocation3 [shape = 'u8[4096]{0}', space=vmem, size = 0x1000, scoped, tag = 'input window, operand 1, single buffered']
    #allocation4 [shape = 's32[1]{0}', space=sflag, size = 0x4, scoped, tag = 'scoped memory for tpu_custom_call.1']
    #allocation5 [shape = 's32[1]{0}', space=sflag, size = 0x4, scoped, tag = 'scoped memory for tpu_custom_call.1']
    #allocation6 [shape = 'u8[512]{0}', space=vmem, size = 0x400, scoped, tag = 'output window, operand 0, single buffered']
    %18 = vsyncpa [#allocation4], 0
    %19 = vsyncpa [#allocation5], 0
    // Predicated region
    $region2: #{tpu_custom_call.1} parent=1 // pred_check
      _
    $region3: #{tpu_custom_call.1} parent=1 // pred_check_branch
      %21 = sbr.rel (0) target = $region5
    $region4: #{tpu_custom_call.1} parent=1 // pred_region
      _
    $region5: #{tpu_custom_call.1} parent=1 // pred_fallthru
      _
    // Predicated region
    $region6: #{tpu_custom_call.1} parent=1 // pred_check
      _
    $region7: #{tpu_custom_call.1} parent=1 // pred_check_branch
      %23 = sbr.rel (0) target = $region9
    $region8: #{tpu_custom_call.1} parent=1 // pred_region
      %s25 = ssub.s32 128, 128
      %26 = vsyncadd [#allocation4], %s25
      %s28 = sshll.u32 [#allocation3], 4
      %s29 = int_to_ptr.vmem [resolvable:$true] %s28
      %31 = dma.hbm_to_vmem [thread:$0]  %s1, 128, %s29, [#allocation4]
    $region9: #{tpu_custom_call.1} parent=1 // pred_fallthru
      _
    // Predicated region
    $region10: #{tpu_custom_call.1} parent=1 // pred_check
      _
    $region11: #{tpu_custom_call.1} parent=1 // pred_check_branch
      %33 = sbr.rel (0) target = $region13
    $region12: #{tpu_custom_call.1} parent=1 // pred_region
      _
    $region13: #{tpu_custom_call.1} parent=1 // pred_fallthru
      _
    // Predicated region
    $region14: #{tpu_custom_call.1} parent=1 // pred_check
      _
    $region15: #{tpu_custom_call.1} parent=1 // pred_check_branch
      %35 = sbr.rel (0) target = $region17
    $region16: #{tpu_custom_call.1} parent=1 // pred_region
      _
    $region17: #{tpu_custom_call.1} parent=1 // pred_fallthru
      _
    // Predicated region
    $region18: #{tpu_custom_call.1} parent=1 // pred_check
      _
    $region19: #{tpu_custom_call.1} parent=1 // pred_check_branch
      %37 = sbr.rel (0) target = $region21
    $region20: #{tpu_custom_call.1} parent=1 // pred_region
      _
    $region21: #{tpu_custom_call.1} parent=1 // pred_fallthru
      _
    // Predicated region
    $region22: #{tpu_custom_call.1} parent=1 // pred_check
      _
    $region23: #{tpu_custom_call.1} parent=1 // pred_check_branch
      %39 = sbr.rel (0) target = $region25
    $region24: #{tpu_custom_call.1} parent=1 // pred_region
      _
    $region25: #{tpu_custom_call.1} parent=1 // pred_fallthru
      _
    // Predicated region
    $region26: #{tpu_custom_call.1} parent=1 // pred_check
      _
    $region27: #{tpu_custom_call.1} parent=1 // pred_check_branch
      %41 = sbr.rel (0) target = $region29
    $region28: #{tpu_custom_call.1} parent=1 // pred_region
      _
    $region29: #{tpu_custom_call.1} parent=1 // pred_fallthru
      _
    // Predicated region
    $region30: #{tpu_custom_call.1} parent=1 // pred_check
      _
    $region31: #{tpu_custom_call.1} parent=1 // pred_check_branch
      %43 = sbr.rel (0) target = $region33
    $region32: #{tpu_custom_call.1} parent=1 // pred_region
      _
    $region33: #{tpu_custom_call.1} parent=1 // pred_fallthru
      _
    // Predicated region
    $region34: #{tpu_custom_call.1} parent=1 // pred_check
      _
    $region35: #{tpu_custom_call.1} parent=1 // pred_check_branch
      %45 = sbr.rel (0) target = $region37
    $region36: #{tpu_custom_call.1} parent=1 // pred_region
      _
    $region37: #{tpu_custom_call.1} parent=1 // pred_fallthru
      _
    // Predicated region
    $region38: #{tpu_custom_call.1} parent=1 // pred_check
      _
    $region39: #{tpu_custom_call.1} parent=1 // pred_check_branch
      %47 = sbr.rel (0) target = $region41
    $region40: #{tpu_custom_call.1} parent=1 // pred_region
      _
    $region41: #{tpu_custom_call.1} parent=1 // pred_fallthru
      _
    // Predicated region
    $region42: #{tpu_custom_call.1} parent=1 // pred_check
      _
    $region43: #{tpu_custom_call.1} parent=1 // pred_check_branch
      %49 = sbr.rel (0) target = $region45
    $region44: #{tpu_custom_call.1} parent=1 // pred_region
      _
    $region45: #{tpu_custom_call.1} parent=1 // pred_fallthru
      _
    // Predicated region
    $region46: #{tpu_custom_call.1} parent=1 // pred_check
      _
    $region47: #{tpu_custom_call.1} parent=1 // pred_check_branch
      %51 = sbr.rel (0) target = $region49
    $region48: #{tpu_custom_call.1} parent=1 // pred_region
      %52 = dma.done [#allocation4], 128
    $region49: #{tpu_custom_call.1} parent=1 // pred_fallthru
      _
    %v54 = vld [vmem:[#allocation3] sm:$0xff]
    %v55 = vlaneseq
    %v56 = vand.u32 %v55, 127
    %57 = vset.pattern.permute.xlu0 0
    %58 = vperm.xlu0 %57, %v54
    %v59 = vpop.permute.xlu0 %58
    %vm60 = vcmp.eq.s32.totalorder %v56, %v59
    %v61 = vsel %vm60, 1, 0
    %v62 = vcvt.s32.f32 %v61
    %v63 = vadd.f32 %v62, 0.0
    %64 = vset.pattern.permute.xlu0 1
    %65 = vperm.xlu0 %64, %v54
    %v66 = vpop.permute.xlu0 %65
    %vm67 = vcmp.eq.s32.totalorder %v56, %v66
    %v68 = vsel %vm67, 1, 0
    %v69 = vcvt.s32.f32 %v68
    %v70 = vadd.f32 %v63, %v69
    %71 = vset.pattern.permute.xlu0 2
    %72 = vperm.xlu0 %71, %v54
    %v73 = vpop.permute.xlu0 %72
    %vm74 = vcmp.eq.s32.totalorder %v56, %v73
    %v75 = vsel %vm74, 1, 0
    %v76 = vcvt.s32.f32 %v75
    %v77 = vadd.f32 %v70, %v76
    %78 = vset.pattern.permute.xlu0 3
    %79 = vperm.xlu0 %78, %v54
    %v80 = vpop.permute.xlu0 %79
    %vm81 = vcmp.eq.s32.totalorder %v56, %v80
    %v82 = vsel %vm81, 1, 0
    %v83 = vcvt.s32.f32 %v82
    %v84 = vadd.f32 %v77, %v83
    %85 = vset.pattern.permute.xlu0 4
    %86 = vperm.xlu0 %85, %v54
    %v87 = vpop.permute.xlu0 %86
    %vm88 = vcmp.eq.s32.totalorder %v56, %v87
    %v89 = vsel %vm88, 1, 0
    %v90 = vcvt.s32.f32 %v89
    %v91 = vadd.f32 %v84, %v90
    %92 = vset.pattern.permute.xlu0 5
    %93 = vperm.xlu0 %92, %v54
    %v94 = vpop.permute.xlu0 %93
    %vm95 = vcmp.eq.s32.totalorder %v56, %v94
    %v96 = vsel %vm95, 1, 0
    %v97 = vcvt.s32.f32 %v96
    %v98 = vadd.f32 %v91, %v97
    %99 = vset.pattern.permute.xlu0 6
    %100 = vperm.xlu0 %99, %v54
    %v101 = vpop.permute.xlu0 %100
    %vm102 = vcmp.eq.s32.totalorder %v56, %v101
    %v103 = vsel %vm102, 1, 0
    %v104 = vcvt.s32.f32 %v103
    %v105 = vadd.f32 %v98, %v104
    %v106 = vpack.c.bf16 %v105, %v105
    %v107 = vld [vmem:[%s2] sm:$0xf]
    %v108 = vld [vmem:[%s2 + $0x4] sm:$0xf]
    %v109 = vld [vmem:[%s2 + $0x8] sm:$0xf]
    %v110 = vld [vmem:[%s2 + $0xc] sm:$0xf]
    %v111 = vld [vmem:[%s2 + $0x10] sm:$0xf]
    %v112 = vld [vmem:[%s2 + $0x14] sm:$0xf]
    %v113 = vld [vmem:[%s2 + $0x18] sm:$0xf]
    %v114 = vld [vmem:[%s2 + $0x1c] sm:$0xf]
    %v115 = vld [vmem:[%s2 + $0x20] sm:$0xf]
    %v116 = vld [vmem:[%s2 + $0x24] sm:$0xf]
    %v117 = vld [vmem:[%s2 + $0x28] sm:$0xf]
    %v118 = vld [vmem:[%s2 + $0x2c] sm:$0xf]
    %v119 = vld [vmem:[%s2 + $0x30] sm:$0xf]
    %v120 = vld [vmem:[%s2 + $0x34] sm:$0xf]
    %v121 = vld [vmem:[%s2 + $0x38] sm:$0xf]
    %v122 = vld [vmem:[%s2 + $0x3c] sm:$0xf]
    %v139 = vunpack.c.l.b16 %v107
    %v140 = vunpack.c.l.b16 %v108
    %v141 = vunpack.c.l.b16 %v109
    %v142 = vunpack.c.l.b16 %v110
    %v143 = vunpack.c.l.b16 %v111
    %v144 = vunpack.c.l.b16 %v112
    %v145 = vunpack.c.l.b16 %v113
    %v146 = vunpack.c.l.b16 %v114
    %v147 = vunpack.c.l.b16 %v115
    %v148 = vunpack.c.l.b16 %v116
    %v149 = vunpack.c.l.b16 %v117
    %v150 = vunpack.c.l.b16 %v118
    %v151 = vunpack.c.l.b16 %v119
    %v152 = vunpack.c.l.b16 %v120
    %v153 = vunpack.c.l.b16 %v121
    %v154 = vunpack.c.l.b16 %v122
    %v155 = vpack.c.b16 %v140, %v139
    %v156 = vpack.c.b16 %v142, %v141
    %v157 = vpack.c.b16 %v144, %v143
    %v158 = vpack.c.b16 %v146, %v145
    %v159 = vpack.c.b16 %v148, %v147
    %v160 = vpack.c.b16 %v150, %v149
    %v161 = vpack.c.b16 %v152, %v151
    %v162 = vpack.c.b16 %v154, %v153
    %171 = vmatprep.subr.bf16.mxu0 0
    %172 = vmatpush1.bf16.msra.mxu0 %v155
    %173 = vmatprep.subr.bf16.mxu0 0
    %174 = vmatpush1.bf16.msra.mxu0 %v156
    %175 = vmatprep.subr.bf16.mxu0 0
    %176 = vmatpush1.bf16.msra.mxu0 %v157
    %177 = vmatprep.subr.bf16.mxu0 0
    %178 = vmatpush1.bf16.msra.mxu0 %v158
    %179 = vmatprep.subr.bf16.mxu0 0
    %180 = vmatpush1.bf16.msra.mxu0 %v159
    %181 = vmatprep.subr.bf16.mxu0 0
    %182 = vmatpush1.bf16.msra.mxu0 %v160
    %183 = vmatprep.subr.bf16.mxu0 0
    %184 = vmatpush1.bf16.msra.mxu0 %v161
    %185 = vmatprep.subr.bf16.mxu0 0
    %186 = vmatpush1.bf16.msra.mxu0 %v162
    %187 = vmatprep.subr.bf16.mxu0 0
    %188 = vmatpush1.bf16.msra.mxu0 0
    %189 = vmatprep.subr.bf16.mxu0 0
    %190 = vmatpush1.bf16.msra.mxu0 0
    %191 = vmatprep.subr.bf16.mxu0 0
    %192 = vmatpush1.bf16.msra.mxu0 0
    %193 = vmatprep.subr.bf16.mxu0 0
    %194 = vmatpush1.bf16.msra.mxu0 0
    %195 = vmatprep.subr.bf16.mxu0 0
    %196 = vmatpush1.bf16.msra.mxu0 0
    %197 = vmatprep.subr.bf16.mxu0 0
    %198 = vmatpush1.bf16.msra.mxu0 0
    %199 = vmatprep.subr.bf16.mxu0 0
    %200 = vmatpush1.bf16.msra.mxu0 0
    %201 = vmatprep.subr.bf16.mxu0 0
    %202 = vmatpush1.bf16.msra.mxu0 0
    %203 = vmatprep.mubr.bf16.mxu0 0
    %204 = vmatmul.mubr.bf16.gmra.mrb[0].mxu0 %v106
    %v205 = vpop.f32.mrb[0].mxu0
    %v206 = vadd.f32 0.0, %v205
    %v207 = vpop.f32.mrb[0].mxu0
    %v208 = vpop.f32.mrb[0].mxu0
    %v209 = vpop.f32.mrb[0].mxu0
    %210 = vdwg.mxu0
    %v211 = vld [vmem:[%s0] sm:$0xff]
    %v212 = vld [vmem:[%s3] sm:$0xf]
    %v213 = vld [vmem:[%s3 + $0x4] sm:$0xf]
    %v214 = vld [vmem:[%s3 + $0x8] sm:$0xf]
    %v215 = vld [vmem:[%s3 + $0xc] sm:$0xf]
    %v216 = vld [vmem:[%s3 + $0x10] sm:$0xf]
    %v217 = vld [vmem:[%s3 + $0x14] sm:$0xf]
    %v218 = vld [vmem:[%s3 + $0x18] sm:$0xf]
    %v219 = vld [vmem:[%s3 + $0x1c] sm:$0xf]
    %v220 = vld [vmem:[%s3 + $0x20] sm:$0xf]
    %v221 = vld [vmem:[%s3 + $0x24] sm:$0xf]
    %v222 = vld [vmem:[%s3 + $0x28] sm:$0xf]
    %v223 = vld [vmem:[%s3 + $0x2c] sm:$0xf]
    %v224 = vld [vmem:[%s3 + $0x30] sm:$0xf]
    %v225 = vld [vmem:[%s3 + $0x34] sm:$0xf]
    %v226 = vld [vmem:[%s3 + $0x38] sm:$0xf]
    %v227 = vld [vmem:[%s3 + $0x3c] sm:$0xf]
    %v228 = vld [vmem:[%s3 + $0x40] sm:$0xf]
    %v229 = vld [vmem:[%s3 + $0x44] sm:$0xf]
    %v230 = vld [vmem:[%s3 + $0x48] sm:$0xf]
    %v231 = vld [vmem:[%s3 + $0x4c] sm:$0xf]
    %v232 = vld [vmem:[%s3 + $0x50] sm:$0xf]
    %v233 = vld [vmem:[%s3 + $0x54] sm:$0xf]
    %v234 = vld [vmem:[%s3 + $0x58] sm:$0xf]
    %v235 = vld [vmem:[%s3 + $0x5c] sm:$0xf]
    %v236 = vld [vmem:[%s3 + $0x60] sm:$0xf]
    %v237 = vld [vmem:[%s3 + $0x64] sm:$0xf]
    %v238 = vld [vmem:[%s3 + $0x68] sm:$0xf]
    %v239 = vld [vmem:[%s3 + $0x6c] sm:$0xf]
    %v240 = vld [vmem:[%s3 + $0x70] sm:$0xf]
    %v241 = vld [vmem:[%s3 + $0x74] sm:$0xf]
    %v242 = vld [vmem:[%s3 + $0x78] sm:$0xf]
    %v243 = vld [vmem:[%s3 + $0x7c] sm:$0xf]
    %v244 = vld [vmem:[%s4] sm:$0x1]
    %v246 = vlaneseq
    %v247 = vshrl.u32 %v246, 7
    %v248 = vsub.s32 0, %v247
    %v249 = vrot.slane %v244, %v248
    %v252 = vunpack.c.l.b16 %v211
    %v253 = vunpack.c.h.b16 %v211
    %v254 = vpack.c.b16 %v252, %v252
    %v255 = vpack.c.b16 %v253, %v253
    %v290 = vunpack.c.l.b16 %v212
    %v291 = vunpack.c.l.b16 %v213
    %v292 = vunpack.c.l.b16 %v214
    %v293 = vunpack.c.l.b16 %v215
    %v294 = vunpack.c.l.b16 %v216
    %v295 = vunpack.c.l.b16 %v217
    %v296 = vunpack.c.l.b16 %v218
    %v297 = vunpack.c.l.b16 %v219
    %v298 = vunpack.c.l.b16 %v220
    %v299 = vunpack.c.l.b16 %v221
    %v300 = vunpack.c.l.b16 %v222
    %v301 = vunpack.c.l.b16 %v223
    %v302 = vunpack.c.l.b16 %v224
    %v303 = vunpack.c.l.b16 %v225
    %v304 = vunpack.c.l.b16 %v226
    %v305 = vunpack.c.l.b16 %v227
    %v306 = vunpack.c.l.b16 %v228
    %v307 = vunpack.c.l.b16 %v229
    %v308 = vunpack.c.l.b16 %v230
    %v309 = vunpack.c.l.b16 %v231
    %v310 = vunpack.c.l.b16 %v232
    %v311 = vunpack.c.l.b16 %v233
    %v312 = vunpack.c.l.b16 %v234
    %v313 = vunpack.c.l.b16 %v235
    %v314 = vunpack.c.l.b16 %v236
    %v315 = vunpack.c.l.b16 %v237
    %v316 = vunpack.c.l.b16 %v238
    %v317 = vunpack.c.l.b16 %v239
    %v318 = vunpack.c.l.b16 %v240
    %v319 = vunpack.c.l.b16 %v241
    %v320 = vunpack.c.l.b16 %v242
    %v321 = vunpack.c.l.b16 %v243
    %v322 = vpack.c.b16 %v291, %v290
    %v323 = vpack.c.b16 %v293, %v292
    %v324 = vpack.c.b16 %v295, %v294
    %v325 = vpack.c.b16 %v297, %v296
    %v326 = vpack.c.b16 %v299, %v298
    %v327 = vpack.c.b16 %v301, %v300
    %v328 = vpack.c.b16 %v303, %v302
    %v329 = vpack.c.b16 %v305, %v304
    %v330 = vpack.c.b16 %v307, %v306
    %v331 = vpack.c.b16 %v309, %v308
    %v332 = vpack.c.b16 %v311, %v310
    %v333 = vpack.c.b16 %v313, %v312
    %v334 = vpack.c.b16 %v315, %v314
    %v335 = vpack.c.b16 %v317, %v316
    %v336 = vpack.c.b16 %v319, %v318
    %v337 = vpack.c.b16 %v321, %v320
    %354 = vmatprep.subr.bf16.mxu0 0
    %355 = vmatpush1.bf16.msra.mxu0 %v322
    %356 = vmatprep.subr.bf16.mxu0 0
    %357 = vmatpush1.bf16.msra.mxu0 %v323
    %358 = vmatprep.subr.bf16.mxu0 0
    %359 = vmatpush1.bf16.msra.mxu0 %v324
    %360 = vmatprep.subr.bf16.mxu0 0
    %361 = vmatpush1.bf16.msra.mxu0 %v325
    %362 = vmatprep.subr.bf16.mxu0 0
    %363 = vmatpush1.bf16.msra.mxu0 %v326
    %364 = vmatprep.subr.bf16.mxu0 0
    %365 = vmatpush1.bf16.msra.mxu0 %v327
    %366 = vmatprep.subr.bf16.mxu0 0
    %367 = vmatpush1.bf16.msra.mxu0 %v328
    %368 = vmatprep.subr.bf16.mxu0 0
    %369 = vmatpush1.bf16.msra.mxu0 %v329
    %370 = vmatprep.subr.bf16.mxu0 0
    %371 = vmatpush1.bf16.msra.mxu0 %v330
    %372 = vmatprep.subr.bf16.mxu0 0
    %373 = vmatpush1.bf16.msra.mxu0 %v331
    %374 = vmatprep.subr.bf16.mxu0 0
    %375 = vmatpush1.bf16.msra.mxu0 %v332
    %376 = vmatprep.subr.bf16.mxu0 0
    %377 = vmatpush1.bf16.msra.mxu0 %v333
    %378 = vmatprep.subr.bf16.mxu0 0
    %379 = vmatpush1.bf16.msra.mxu0 %v334
    %380 = vmatprep.subr.bf16.mxu0 0
    %381 = vmatpush1.bf16.msra.mxu0 %v335
    %382 = vmatprep.subr.bf16.mxu0 0
    %383 = vmatpush1.bf16.msra.mxu0 %v336
    %384 = vmatprep.subr.bf16.mxu0 0
    %385 = vmatpush1.bf16.msra.mxu0 %v337
    %386 = vmatprep.mubr.bf16.mxu0 %v255
    %387 = vmatmul.mubr.bf16.gmra.mrb[0].mxu0 %v254
    %v388 = vpop.f32.mrb[0].mxu0
    %v389 = vadd.f32 %v249, %v388
    %v390 = vpop.f32.mrb[0].mxu0
    %v391 = vpop.f32.mrb[0].mxu0
    %v392 = vpop.f32.mrb[0].mxu0
    %393 = vdwg.mxu0
    %v394 = vmax.f32 %v389, 0.0
    %v395 = vpack.c.bf16 %v394, %v394
    %v396 = vld [vmem:[%s5] sm:$0xf]
    %v397 = vld [vmem:[%s5 + $0x4] sm:$0xf]
    %v398 = vld [vmem:[%s5 + $0x8] sm:$0xf]
    %v399 = vld [vmem:[%s5 + $0xc] sm:$0xf]
    %v400 = vld [vmem:[%s5 + $0x10] sm:$0xf]
    %v401 = vld [vmem:[%s5 + $0x14] sm:$0xf]
    %v402 = vld [vmem:[%s5 + $0x18] sm:$0xf]
    %v403 = vld [vmem:[%s5 + $0x1c] sm:$0xf]
    %v404 = vld [vmem:[%s5 + $0x20] sm:$0xf]
    %v405 = vld [vmem:[%s5 + $0x24] sm:$0xf]
    %v406 = vld [vmem:[%s5 + $0x28] sm:$0xf]
    %v407 = vld [vmem:[%s5 + $0x2c] sm:$0xf]
    %v408 = vld [vmem:[%s5 + $0x30] sm:$0xf]
    %v409 = vld [vmem:[%s5 + $0x34] sm:$0xf]
    %v410 = vld [vmem:[%s5 + $0x38] sm:$0xf]
    %v411 = vld [vmem:[%s5 + $0x3c] sm:$0xf]
    %v412 = vld [vmem:[%s6] sm:$0x1]
    %v414 = vlaneseq
    %v415 = vshrl.u32 %v414, 7
    %v416 = vsub.s32 0, %v415
    %v417 = vrot.slane %v412, %v416
    %v435 = vunpack.c.l.b16 %v396
    %v436 = vunpack.c.l.b16 %v397
    %v437 = vunpack.c.l.b16 %v398
    %v438 = vunpack.c.l.b16 %v399
    %v439 = vunpack.c.l.b16 %v400
    %v440 = vunpack.c.l.b16 %v401
    %v441 = vunpack.c.l.b16 %v402
    %v442 = vunpack.c.l.b16 %v403
    %v443 = vunpack.c.l.b16 %v404
    %v444 = vunpack.c.l.b16 %v405
    %v445 = vunpack.c.l.b16 %v406
    %v446 = vunpack.c.l.b16 %v407
    %v447 = vunpack.c.l.b16 %v408
    %v448 = vunpack.c.l.b16 %v409
    %v449 = vunpack.c.l.b16 %v410
    %v450 = vunpack.c.l.b16 %v411
    %v451 = vpack.c.b16 %v436, %v435
    %v452 = vpack.c.b16 %v438, %v437
    %v453 = vpack.c.b16 %v440, %v439
    %v454 = vpack.c.b16 %v442, %v441
    %v455 = vpack.c.b16 %v444, %v443
    %v456 = vpack.c.b16 %v446, %v445
    %v457 = vpack.c.b16 %v448, %v447
    %v458 = vpack.c.b16 %v450, %v449
    %467 = vmatprep.subr.bf16.mxu0 0
    %468 = vmatpush1.bf16.msra.mxu0 %v451
    %469 = vmatprep.subr.bf16.mxu0 0
    %470 = vmatpush1.bf16.msra.mxu0 %v452
    %471 = vmatprep.subr.bf16.mxu0 0
    %472 = vmatpush1.bf16.msra.mxu0 %v453
    %473 = vmatprep.subr.bf16.mxu0 0
    %474 = vmatpush1.bf16.msra.mxu0 %v454
    %475 = vmatprep.subr.bf16.mxu0 0
    %476 = vmatpush1.bf16.msra.mxu0 %v455
    %477 = vmatprep.subr.bf16.mxu0 0
    %478 = vmatpush1.bf16.msra.mxu0 %v456
    %479 = vmatprep.subr.bf16.mxu0 0
    %480 = vmatpush1.bf16.msra.mxu0 %v457
    %481 = vmatprep.subr.bf16.mxu0 0
    %482 = vmatpush1.bf16.msra.mxu0 %v458
    %483 = vmatprep.subr.bf16.mxu0 0
    %484 = vmatpush1.bf16.msra.mxu0 0
    %485 = vmatprep.subr.bf16.mxu0 0
    %486 = vmatpush1.bf16.msra.mxu0 0
    %487 = vmatprep.subr.bf16.mxu0 0
    %488 = vmatpush1.bf16.msra.mxu0 0
    %489 = vmatprep.subr.bf16.mxu0 0
    %490 = vmatpush1.bf16.msra.mxu0 0
    %491 = vmatprep.subr.bf16.mxu0 0
    %492 = vmatpush1.bf16.msra.mxu0 0
    %493 = vmatprep.subr.bf16.mxu0 0
    %494 = vmatpush1.bf16.msra.mxu0 0
    %495 = vmatprep.subr.bf16.mxu0 0
    %496 = vmatpush1.bf16.msra.mxu0 0
    %497 = vmatprep.subr.bf16.mxu0 0
    %498 = vmatpush1.bf16.msra.mxu0 0
    %499 = vmatprep.mubr.bf16.mxu0 0
    %500 = vmatmul.mubr.bf16.gmra.mrb[0].mxu0 %v395
    %v501 = vpop.f32.mrb[0].mxu0
    %v502 = vadd.f32 %v417, %v501
    %v503 = vpop.f32.mrb[0].mxu0
    %v504 = vpop.f32.mrb[0].mxu0
    %v505 = vpop.f32.mrb[0].mxu0
    %506 = vdwg.mxu0
    %v507 = vmax.f32 %v502, 0.0
    %v508 = vpack.c.bf16 %v507, %v507
    %v509 = vld [vmem:[%s7] sm:$0xf]
    %v510 = vld [vmem:[%s7 + $0x4] sm:$0xf]
    %v511 = vld [vmem:[%s7 + $0x8] sm:$0xf]
    %v512 = vld [vmem:[%s7 + $0xc] sm:$0xf]
    %v513 = vld [vmem:[%s7 + $0x10] sm:$0xf]
    %v514 = vld [vmem:[%s7 + $0x14] sm:$0xf]
    %v515 = vld [vmem:[%s7 + $0x18] sm:$0xf]
    %v516 = vld [vmem:[%s7 + $0x1c] sm:$0xf]
    %v517 = vld [vmem:[%s7 + $0x20] sm:$0xf]
    %v518 = vld [vmem:[%s7 + $0x24] sm:$0xf]
    %v519 = vld [vmem:[%s7 + $0x28] sm:$0xf]
    %v520 = vld [vmem:[%s7 + $0x2c] sm:$0xf]
    %v521 = vld [vmem:[%s7 + $0x30] sm:$0xf]
    %v522 = vld [vmem:[%s7 + $0x34] sm:$0xf]
    %v523 = vld [vmem:[%s7 + $0x38] sm:$0xf]
    %v524 = vld [vmem:[%s7 + $0x3c] sm:$0xf]
    %v541 = vunpack.c.l.b16 %v509
    %v542 = vunpack.c.l.b16 %v510
    %v543 = vunpack.c.l.b16 %v511
    %v544 = vunpack.c.l.b16 %v512
    %v545 = vunpack.c.l.b16 %v513
    %v546 = vunpack.c.l.b16 %v514
    %v547 = vunpack.c.l.b16 %v515
    %v548 = vunpack.c.l.b16 %v516
    %v549 = vunpack.c.l.b16 %v517
    %v550 = vunpack.c.l.b16 %v518
    %v551 = vunpack.c.l.b16 %v519
    %v552 = vunpack.c.l.b16 %v520
    %v553 = vunpack.c.l.b16 %v521
    %v554 = vunpack.c.l.b16 %v522
    %v555 = vunpack.c.l.b16 %v523
    %v556 = vunpack.c.l.b16 %v524
    %v557 = vpack.c.b16 %v542, %v541
    %v558 = vpack.c.b16 %v544, %v543
    %v559 = vpack.c.b16 %v546, %v545
    %v560 = vpack.c.b16 %v548, %v547
    %v561 = vpack.c.b16 %v550, %v549
    %v562 = vpack.c.b16 %v552, %v551
    %v563 = vpack.c.b16 %v554, %v553
    %v564 = vpack.c.b16 %v556, %v555
    %573 = vmatprep.subr.bf16.mxu0 0
    %574 = vmatpush1.bf16.msra.mxu0 %v557
    %575 = vmatprep.subr.bf16.mxu0 0
    %576 = vmatpush1.bf16.msra.mxu0 %v558
    %577 = vmatprep.subr.bf16.mxu0 0
    %578 = vmatpush1.bf16.msra.mxu0 %v559
    %579 = vmatprep.subr.bf16.mxu0 0
    %580 = vmatpush1.bf16.msra.mxu0 %v560
    %581 = vmatprep.subr.bf16.mxu0 0
    %582 = vmatpush1.bf16.msra.mxu0 %v561
    %583 = vmatprep.subr.bf16.mxu0 0
    %584 = vmatpush1.bf16.msra.mxu0 %v562
    %585 = vmatprep.subr.bf16.mxu0 0
    %586 = vmatpush1.bf16.msra.mxu0 %v563
    %587 = vmatprep.subr.bf16.mxu0 0
    %588 = vmatpush1.bf16.msra.mxu0 %v564
    %589 = vmatprep.subr.bf16.mxu0 0
    %590 = vmatpush1.bf16.msra.mxu0 0
    %591 = vmatprep.subr.bf16.mxu0 0
    %592 = vmatpush1.bf16.msra.mxu0 0
    %593 = vmatprep.subr.bf16.mxu0 0
    %594 = vmatpush1.bf16.msra.mxu0 0
    %595 = vmatprep.subr.bf16.mxu0 0
    %596 = vmatpush1.bf16.msra.mxu0 0
    %597 = vmatprep.subr.bf16.mxu0 0
    %598 = vmatpush1.bf16.msra.mxu0 0
    %599 = vmatprep.subr.bf16.mxu0 0
    %600 = vmatpush1.bf16.msra.mxu0 0
    %601 = vmatprep.subr.bf16.mxu0 0
    %602 = vmatpush1.bf16.msra.mxu0 0
    %603 = vmatprep.subr.bf16.mxu0 0
    %604 = vmatpush1.bf16.msra.mxu0 0
    %605 = vmatprep.mubr.bf16.mxu0 0
    %606 = vmatmul.mubr.bf16.gmra.mrb[0].mxu0 %v508
    %v607 = vpop.f32.mrb[0].mxu0
    %v608 = vadd.f32 %v206, %v607
    %v609 = vpop.f32.mrb[0].mxu0
    %v610 = vpop.f32.mrb[0].mxu0
    %v611 = vpop.f32.mrb[0].mxu0
    %612 = vdwg.mxu0
    %v613 = vld [vmem:[%s8] sm:$0x1]
    %v615 = vlaneseq
    %v616 = vshrl.u32 %v615, 7
    %v617 = vsub.s32 0, %v616
    %v618 = vrot.slane %v613, %v617
    %v620 = vadd.f32 %v608, %v618
    %v621 = vmax.f32 %v620, 0.0
    %v622 = vpack.c.bf16 %v621, %v621
    %v623 = vld [vmem:[%s9] sm:$0x1]
    %v624 = vld [vmem:[#allocation2] sm:$0x1]
    %626 = vset.pattern.permute.xlu0 0
    %627 = vperm.xlu0 %626, %v624
    %v628 = vpop.permute.xlu0 %627
    %v630 = vlaneseq
    %v631 = vshrl.u32 %v630, 7
    %v632 = vsub.s32 0, %v631
    %v633 = vrot.slane %v628, %v632
    %vm634 = vcmask 523264
    %v636 = vsel %vm634, %v623, 0
    %v639 = vsel %vm634, %v622, 0
    %641 = vmatprep.subr.bf16.mxu0 0
    %642 = vmatpush1.bf16.xpose.msra.mxu0 %v639
    %643 = vmatprep.subr.bf16.mxu0 0
    %644 = vmatpush1.bf16.xpose.msra.mxu0 0
    %645 = vmatprep.subr.bf16.mxu0 0
    %646 = vmatpush1.bf16.xpose.msra.mxu0 0
    %647 = vmatprep.subr.bf16.mxu0 0
    %648 = vmatpush1.bf16.xpose.msra.mxu0 0
    %649 = vmatprep.subr.bf16.mxu0 0
    %650 = vmatpush1.bf16.xpose.msra.mxu0 0
    %651 = vmatprep.subr.bf16.mxu0 0
    %652 = vmatpush1.bf16.xpose.msra.mxu0 0
    %653 = vmatprep.subr.bf16.mxu0 0
    %654 = vmatpush1.bf16.xpose.msra.mxu0 0
    %655 = vmatprep.subr.bf16.mxu0 0
    %656 = vmatpush1.bf16.xpose.msra.mxu0 0
    %657 = vmatprep.subr.bf16.mxu0 0
    %658 = vmatpush1.bf16.xpose.msra.mxu0 0
    %659 = vmatprep.subr.bf16.mxu0 0
    %660 = vmatpush1.bf16.xpose.msra.mxu0 0
    %661 = vmatprep.subr.bf16.mxu0 0
    %662 = vmatpush1.bf16.xpose.msra.mxu0 0
    %663 = vmatprep.subr.bf16.mxu0 0
    %664 = vmatpush1.bf16.xpose.msra.mxu0 0
    %665 = vmatprep.subr.bf16.mxu0 0
    %666 = vmatpush1.bf16.xpose.msra.mxu0 0
    %667 = vmatprep.subr.bf16.mxu0 0
    %668 = vmatpush1.bf16.xpose.msra.mxu0 0
    %669 = vmatprep.subr.bf16.mxu0 0
    %670 = vmatpush1.bf16.xpose.msra.mxu0 0
    %671 = vmatprep.subr.bf16.mxu0 0
    %672 = vmatpush1.bf16.xpose.msra.mxu0 0
    %673 = vmatprep.mubr.bf16.mxu0 0
    %674 = vmatmul.mubr.bf16.gmra.mrb[0].mxu0 %v636
    %v675 = vpop.f32.mrb[0].mxu0
    %v676 = vadd.f32 %v633, %v675
    %v677 = vpop.f32.mrb[0].mxu0
    %v678 = vpop.f32.mrb[0].mxu0
    %v679 = vpop.f32.mrb[0].mxu0
    %680 = vdwg.mxu0
    %vm681 = vcmask 57344
    %682 = vst.msk [vmem:[#allocation6] sm:$0x1] %vm681, %v676
    // Predicated region
    $region50: #{tpu_custom_call.1} parent=1 // pred_check
      _
    $region51: #{tpu_custom_call.1} parent=1 // pred_check_branch
      %684 = sbr.rel (0) target = $region53
    $region52: #{tpu_custom_call.1} parent=1 // pred_region
      %s686 = ssub.s32 16, 16
      %687 = vsyncadd [#allocation5], %s686
      %s689 = sshll.u32 [#allocation6], 4
      %s690 = int_to_ptr.vmem [resolvable:$true] %s689
      %692 = dma.vmem_to_hbm [thread:$0]  %s690, 16, %s11, [#allocation5]
    $region53: #{tpu_custom_call.1} parent=1 // pred_fallthru
      _
    // Predicated region
    $region54: #{tpu_custom_call.1} parent=1 // pred_check
      _
    $region55: #{tpu_custom_call.1} parent=1 // pred_check_branch
      %694 = sbr.rel (0) target = $region57
    $region56: #{tpu_custom_call.1} parent=1 // pred_region
      %695 = dma.done [#allocation5], 16
    $region57: #{tpu_custom_call.1} parent=1 // pred_fallthru
      _
    %696 = vsyncpa [#allocation4], 1
    %697 = vsyncpa [#allocation5], 1

</llo_original>
